<compile_context>
chip_gen: v5e
topology: v5e:2x2
jax: 0.10.0
libtpu: 0.0.40
codegen_flags: <defaults>
</compile_context>

<pallas_src>
import functools
import math

import jax
import jax.numpy as jnp
from jax.experimental import pallas as pl
from jax.experimental.pallas import tpu as pltpu


# Below this many MACs the kernel-launch / pipeline overhead dominates and a
# fused XLA einsum is strictly faster on every TPU generation.
_PALLAS_MIN_WORK = 1 << 20  # m * k * n

_TM_CANDIDATES = (1024, 512, 256, 128, 64, 32, 16, 8)


def _round_up(x, mult):
    return ((x + mult - 1) // mult) * mult


def _vmem_numbers():
    """Per-generation VMEM working-set budget and scoped limit."""
    try:
        cap = int(pltpu.get_tpu_info().vmem_capacity_bytes)
    except Exception:
        cap = 64 * 1024 * 1024  # conservative fallback (v7x-sized)
    if cap >= (96 << 20):       # v5e / v6e: 128 MiB physical VMEM
        return 48 << 20, 96 << 20
    # v7x: 64 MiB physical -> leave headroom for Mosaic internal scratch.
    return 22 << 20, 36 << 20


_VMEM_BUDGET_BYTES, _VMEM_LIMIT_BYTES = _vmem_numbers()


# ----------------------------------------------------------------------------
# Kernels
# ----------------------------------------------------------------------------
def _matmul_kernel_noacc(x_ref, w_ref, o_ref):
    """Single-K-block tile: o = x @ w (f32 MXU accumulate, cast on store)."""
    o_ref[...] = jnp.dot(
        x_ref[...], w_ref[...], preferred_element_type=jnp.float32
    ).astype(o_ref.dtype)


def _matmul_kernel_acc(x_ref, w_ref, o_ref, acc_ref):
    """Multi-K-step tile: accumulate over the (last, 'arbitrary') K grid axis."""
    @pl.when(pl.program_id(2) == 0)
    def _():
        acc_ref[...] = jnp.zeros_like(acc_ref)

    acc_ref[...] += jnp.dot(
        x_ref[...], w_ref[...], preferred_element_type=jnp.float32
    )

    @pl.when(pl.program_id(2) == pl.num_programs(2) - 1)
    def _():
        o_ref[...] = acc_ref[...].astype(o_ref.dtype)


# ----------------------------------------------------------------------------
# Tile selection
# ----------------------------------------------------------------------------
def _ensure_two_m_tiles(tm, m):
    """v7x has 2 TensorCores: make the 'parallel' M axis at least 2 tiles."""
    while tm > 8 and -(-m // tm) < 2:
        tm //= 2
    return tm


def _choose_tm_fast(m, k, n, in_bytes, out_bytes, budget):
    """Largest power-of-two row tile whose working set fits the VMEM budget."""
    m8 = _round_up(m, 8)
    k_lane = _round_up(k, 128)
    n_lane = _round_up(n, 128)
    w_bytes = 2 * _round_up(k, 8) * n_lane * in_bytes  # resident W (conservative x2)
    tm = 8
    for cand in _TM_CANDIDATES:
        if cand > m8:
            continue
        footprint = (w_bytes
                     + 2 * cand * k_lane * in_bytes     # double-buffered x tile
                     + 2 * cand * n_lane * out_bytes)   # double-buffered out tile
        if footprint <= budget:
            tm = cand
            break
    return _ensure_two_m_tiles(tm, m)


def _choose_tiles_tiled(m, k, n, in_bytes, out_bytes, budget):
    """(tm, tn, tk) for the general tiled path (weight too big for VMEM)."""
    big = budget >= (32 << 20)
    cap = 1024 if big else 512
    tk = min(cap, _round_up(k, 128))
    tn = min(cap, _round_up(n, 128))
    m8 = _round_up(m, 8)
    tm = 8
    for cand in _TM_CANDIDATES:
        if cand > m8:
            continue
        footprint = (2 * (cand * tk + tk * tn) * in_bytes   # x + w double buffers
                     + 2 * cand * tn * out_bytes            # out double buffer
                     + cand * tn * 4)                       # f32 accumulator
        if footprint <= budget:
            tm = cand
            break
    tm = _ensure_two_m_tiles(tm, m)
    return tm, tn, tk


# ----------------------------------------------------------------------------
# Forward
# ----------------------------------------------------------------------------
@functools.partial(jax.jit, static_argnames=("force_pallas", "use_bf16"))
def value_forward(x, weight, *, force_pallas=False, use_bf16=False):
    """Value.forward: x @ weight.T

    x:      (batch, seq, dim_input)
    weight: (dim_val, dim_input)   -- PyTorch nn.Linear weight layout
    returns (batch, seq, dim_val)

    use_bf16=True casts x / W to bf16 (f32 accumulation kept) -- recommended on
    v6e/v7x (and v5e) when bf16 input rounding is acceptable.
    """
    b, s, k = x.shape
    n = weight.shape[0]
    m = b * s

    # Tiny-problem bypass: one partially-filled MXU pass is not worth a
    # pallas_call; let XLA fuse it.
    if not force_pallas and m * k * n < _PALLAS_MIN_WORK:
        return jnp.einsum("bsk,nk->bsn", x, weight)

    out_dtype = x.dtype
    compute_dtype = jnp.bfloat16 if use_bf16 else x.dtype
    in_bytes = jnp.dtype(compute_dtype).itemsize
    out_bytes = jnp.dtype(out_dtype).itemsize

    x2d = x.reshape(m, k)
    w_kn = weight.T  # one-time (K, N) layout: MXU fast path, no per-tile transpose
    if use_bf16:
        x2d = x2d.astype(compute_dtype)
        w_kn = w_kn.astype(compute_dtype)

    cost = pl.CostEstimate(
        flops=2 * m * k * n,
        transcendentals=0,
        bytes_accessed=(m * k + k * n) * in_bytes + m * n * out_bytes,
    )
    out_shape = jax.ShapeDtypeStruct((m, n), out_dtype)

    # Whole (padded-for-layout) weight comfortably fits in VMEM?  This is the
    # common Value-projection case: keep W resident, 1-D grid over M only,
    # no K axis, no accumulator, no padding of any operand.
    w_resident_bytes = 2 * _round_up(k, 8) * _round_up(n, 128) * in_bytes
    fast_path = w_resident_bytes <= _VMEM_BUDGET_BYTES // 2

    if fast_path:
        tm = _choose_tm_fast(m, k, n, in_bytes, out_bytes, _VMEM_BUDGET_BYTES)
        out2d = pl.pallas_call(
            _matmul_kernel_noacc,
            out_shape=out_shape,
            grid_spec=pltpu.PrefetchScalarGridSpec(
                num_scalar_prefetch=0,
                grid=(pl.cdiv(m, tm),),
                in_specs=[
                    pl.BlockSpec((tm, k), lambda i: (i, 0)),   # x row tile
                    pl.BlockSpec((k, n), lambda i: (0, 0)),    # W resident
                ],
                out_specs=pl.BlockSpec((tm, n), lambda i: (i, 0)),
            ),
            compiler_params=pltpu.CompilerParams(
                dimension_semantics=("parallel",),
                vmem_limit_bytes=_VMEM_LIMIT_BYTES,
            ),
            cost_estimate=cost,
        )(x2d, w_kn)
        return out2d.reshape(b, s, n)

    # ---- General tiled path (large K and/or N) -----------------------------
    tm, tn, tk = _choose_tiles_tiled(m, k, n, in_bytes, out_bytes,
                                     _VMEM_BUDGET_BYTES)
    kp = _round_up(k, tk)
    # K must be zero-padded (partial K blocks would feed garbage into the
    # reduction); M and N stay unpadded -- partial tiles there only produce
    # garbage rows/cols that Pallas never writes back.
    if kp != k:
        x2d = jnp.pad(x2d, ((0, 0), (0, kp - k)))
        w_kn = jnp.pad(w_kn, ((0, kp - k), (0, 0)))
    n_k_steps = kp // tk

    if n_k_steps == 1:
        out2d = pl.pallas_call(
            _matmul_kernel_noacc,
            out_shape=out_shape,
            grid_spec=pltpu.PrefetchScalarGridSpec(
                num_scalar_prefetch=0,
                grid=(pl.cdiv(m, tm), pl.cdiv(n, tn)),
                in_specs=[
                    pl.BlockSpec((tm, kp), lambda i, j: (i, 0)),
                    pl.BlockSpec((kp, tn), lambda i, j: (0, j)),
                ],
                out_specs=pl.BlockSpec((tm, tn), lambda i, j: (i, j)),
            ),
            compiler_params=pltpu.CompilerParams(
                dimension_semantics=("parallel", "parallel"),
                vmem_limit_bytes=_VMEM_LIMIT_BYTES,
            ),
            cost_estimate=cost,
        )(x2d, w_kn)
    else:
        out2d = pl.pallas_call(
            _matmul_kernel_acc,
            out_shape=out_shape,
            grid_spec=pltpu.PrefetchScalarGridSpec(
                num_scalar_prefetch=0,
                grid=(pl.cdiv(m, tm), pl.cdiv(n, tn), n_k_steps),
                in_specs=[
                    pl.BlockSpec((tm, tk), lambda i, j, kk: (i, kk)),
                    pl.BlockSpec((tk, tn), lambda i, j, kk: (kk, j)),
                ],
                out_specs=pl.BlockSpec((tm, tn), lambda i, j, kk: (i, j)),
                scratch_shapes=[pltpu.VMEM((tm, tn), jnp.float32)],
            ),
            compiler_params=pltpu.CompilerParams(
                dimension_semantics=("parallel", "parallel", "arbitrary"),
                vmem_limit_bytes=_VMEM_LIMIT_BYTES,
            ),
            cost_estimate=cost,
        )(x2d, w_kn)

    return out2d.reshape(b, s, n)


if __name__ == "__main__":
    # ---- Shipped module config (small) -------------------------------------
    dim_input = 32
    dim_val = 32
    batch, seq = 2, 8

    key = jax.random.PRNGKey(0)
    k_x, k_w, k_x2, k_w2 = jax.random.split(key, 4)

    # Deterministic init mimicking nn.Linear's uniform(-1/sqrt(in), 1/sqrt(in))
    bound = 1.0 / math.sqrt(dim_input)
    weight = jax.random.uniform(
        k_w, (dim_val, dim_input), dtype=jnp.float32, minval=-bound, maxval=bound
    )
    x = jax.random.normal(k_x, (batch, seq, dim_input), dtype=jnp.float32)

    # Force the Pallas kernel so it is actually exercised on this tiny shape.
    out = value_forward(x, weight, force_pallas=True)
    out = jax.block_until_ready(out)
    ref = jnp.einsum("bsk,nk->bsn", x, weight)
    assert out.shape == (batch, seq, dim_val)
    assert jnp.allclose(out, ref, atol=1e-5, rtol=1e-5)

    # Default path for this size takes the einsum bypass; semantics identical.
    out_bypass = jax.block_until_ready(value_forward(x, weight))
    assert jnp.allclose(out_bypass, ref, atol=1e-5, rtol=1e-5)

    # bf16-compute option (f32 accumulation): looser tolerance.
    out_bf16 = jax.block_until_ready(
        value_forward(x, weight, force_pallas=True, use_bf16=True))
    assert jnp.allclose(out_bf16, ref, atol=2e-2, rtol=2e-2)

    # ---- Second check: non-128-multiple dims, partial M tiles, no padding ---
    b2, s2, k2, n2 = 3, 100, 96, 80
    w2 = jax.random.uniform(
        k_w2, (n2, k2), dtype=jnp.float32,
        minval=-1.0 / math.sqrt(k2), maxval=1.0 / math.sqrt(k2)
    )
    x2 = jax.random.normal(k_x2, (b2, s2, k2), dtype=jnp.float32)
    out2 = jax.block_until_ready(value_forward(x2, w2, force_pallas=True))
    ref2 = jnp.einsum("bsk,nk->bsn", x2, w2)
    assert out2.shape == (b2, s2, n2)
    assert jnp.allclose(out2, ref2, atol=1e-5, rtol=1e-5)

    print("KERNEL_OK")
</pallas_src>

<mosaic_0001>
module attributes {stable_mosaic.version = 11 : i64} {
  func.func @_matmul_kernel_noacc(%arg0: i32, %arg1: memref<8x32xf32, #tpu.memory_space<vmem>>, %arg2: memref<32x32xf32, #tpu.memory_space<vmem>>, %arg3: memref<8x32xf32, #tpu.memory_space<vmem>>) attributes {dimension_semantics = [#tpu.dimension_semantics<parallel>], iteration_bounds = array<i64: 2>, scalar_prefetch = 0 : i64, scratch_operands = 0 : i64, tpu.core_type = #tpu.core_type<tc>, window_params = [{transform_indices = @transform_0, window_bounds = array<i64: 8, 32>}, {pipeline_mode = #tpu.pipeline_mode<synchronous>, transform_indices = @transform_1, window_bounds = array<i64: 32, 32>}, {transform_indices = @transform_2, window_bounds = array<i64: 8, 32>}]} {
    %c0 = arith.constant 0 : index
    %c0_0 = arith.constant 0 : index
    %0 = vector.load %arg1[%c0, %c0_0] : memref<8x32xf32, #tpu.memory_space<vmem>>, vector<8x32xf32>
    %c0_1 = arith.constant 0 : index
    %c0_2 = arith.constant 0 : index
    %1 = vector.load %arg2[%c0_1, %c0_2] : memref<32x32xf32, #tpu.memory_space<vmem>>, vector<32x32xf32>
    %cst = arith.constant dense<0.000000e+00> : vector<8x32xf32>
    %2 = tpu.matmul %0, %1, %cst {dimension_numbers = #tpu.dot_dimension_numbers<[1], [0], [0], [1], [0, 0, 1, 1], [], []>} : vector<8x32xf32>, vector<32x32xf32>, vector<8x32xf32> -> vector<8x32xf32>
    %c0_3 = arith.constant 0 : index
    %c0_4 = arith.constant 0 : index
    %3 = vector.load %arg3[%c0_3, %c0_4] : memref<8x32xf32, #tpu.memory_space<vmem>>, vector<8x32xf32>
    tpu.vector_store %arg3[%c0_3, %c0_4], %2 {strides = array<i32>} : memref<8x32xf32, #tpu.memory_space<vmem>>, vector<8x32xf32>,
    return
  }
  func.func @transform_0(%arg0: i32) -> (i32, i32) {
    %c0_i32 = arith.constant 0 : i32
    %c0_i32_0 = arith.constant 0 : i32
    return %arg0, %c0_i32 : i32, i32
  }
  func.func @transform_1(%arg0: i32) -> (i32, i32) {
    %c0_i32 = arith.constant 0 : i32
    %c0_i32_0 = arith.constant 0 : i32
    %c0_i32_1 = arith.constant 0 : i32
    return %c0_i32, %c0_i32_0 : i32, i32
  }
  func.func @transform_2(%arg0: i32) -> (i32, i32) {
    %c0_i32 = arith.constant 0 : i32
    %c0_i32_0 = arith.constant 0 : i32
    return %arg0, %c0_i32 : i32, i32
  }
}

</mosaic_0001>

<llo_original>
// kernel: value_forward.1
$region0: #{value_forward.1}
  #allocation0 [shape = 'u32[]', space=smem, size = 0x4, offset = 0x4, fixed_abs, tag = 'smem constant byte address 0x4 - core index']
  #allocation1 [shape = 'u32[72,128]{1,0:T(1,128)}', space=vmem, size = 0x9000, scoped, tag = 'internal scratch']
  %s0 = inlined_call_operand.vmem [shape: f32[16,32], index: 0, kind: input, shape index: {}]
  %s1 = inlined_call_operand.vmem [shape: f32[32,32], index: 1, kind: input, shape index: {}]
  %s2 = inlined_call_operand.hbm [shape: f32[16,32], index: 2, kind: output, shape index: {}]
  %s3 = sld [smem:[#allocation0]]
  $region41: #{value_forward.1} parent=0
    _
  %s5 = ssub.s32 1, %s3
  %s6 = scalar_select 0, %s5, %s3
  $region1: #{value_forward.1} parent=0
    #allocation2 [shape = 'u8[8192]{0}', space=vmem, size = 0x2000, scoped, tag = 'output window, operand 0']
    #allocation3 [shape = 's32[2]{0}', space=sflag, size = 0x8, scoped, tag = 'scoped memory for value_forward.1']
    %7 = vsyncpa [#allocation3], 0
    %s8 = scalar_lea.sflag [#allocation3], 1
    %9 = vsyncpa %s8, 0
    loop: start=0, step=1, limit=4
    $region2: #{value_forward.1} parent=1 // loop_pre_header
      _
    $region3: #{value_forward.1} parent=1 // loop_header
      %s11 = sphi 0, %s15
      %p12 = scmp.ge.s32.totalorder %s11, 4
      %s21 = sphi 0, %s23
      %s24 = sphi 0, %s21
      %s25 = sphi 0, %s24
      %s41 = sphi 0, %s25
      %s45 = sphi 0, %s45
      %s47 = sphi 0, %s45
      %s48 = sphi 0, %s47
      %s62 = sphi 0, %s48
      %s68 = sphi 0, %s70
      %s71 = sphi 0, %s68
      %s72 = sphi 0, %s71
      %s88 = sphi 0, %s72
    $region4: #{value_forward.1} parent=1 // loop_header_branch
      %14 = sbr.rel (%p12) target = $region8
    $region5: #{value_forward.1} parent=1 // loop_body
      %s16 = ssub.s32 %s11, 1
      %s17 = ssub.s32 %s11, 2
      %s18 = sadd.s32 %s11, 1
      %s19 = ssub.s32 %s11, %s18
      %p20 = scmp.eq.s32.totalorder %s19, 0
      %s22 = sadd.s32 %s21, 1
      %s23 = scalar_select %p20, %s21, %s22
      %p26 = pneg %p20
      %p27 = scmp.eq.s32.totalorder %s11, 1
      %p28 = por %p26, %p27
      %p29 = scmp.ne.s32.totalorder %s21, %s24
      %p30 = scmp.eq.s32.totalorder %s11, 0
      %p31 = por %p29, %p30
      %p32 = scmp.ne.s32.totalorder %s21, %s24
      %p33 = scmp.eq.s32.totalorder %s16, 1
      %p34 = por %p32, %p33
      %p35 = scmp.ne.s32.totalorder %s24, %s25
      %p36 = scmp.eq.s32.totalorder %s16, 0
      %p37 = por %p35, %p36
      %p38 = scmp.ne.s32.totalorder %s24, %s25
      %p39 = scmp.eq.s32.totalorder %s17, 1
      %p40 = por %p38, %p39
      %p42 = scmp.ne.s32.totalorder %s25, %s41
      %p43 = scmp.eq.s32.totalorder %s17, 0
      %p44 = por %p42, %p43
      %s46 = sadd.s32 %s45, 1
      %p49 = scmp.eq.s32.totalorder %s11, 1
      %p50 = scmp.ne.s32.totalorder %s45, %s47
      %p51 = scmp.eq.s32.totalorder %s11, 0
      %p52 = por %p50, %p51
      %p53 = scmp.ne.s32.totalorder %s45, %s47
      %p54 = scmp.eq.s32.totalorder %s16, 1
      %p55 = por %p53, %p54
      %p56 = scmp.ne.s32.totalorder %s47, %s48
      %p57 = scmp.eq.s32.totalorder %s16, 0
      %p58 = por %p56, %p57
      %p59 = scmp.ne.s32.totalorder %s47, %s48
      %p60 = scmp.eq.s32.totalorder %s17, 1
      %p61 = por %p59, %p60
      %p63 = scmp.ne.s32.totalorder %s48, %s62
      %p64 = scmp.eq.s32.totalorder %s17, 0
      %p65 = por %p63, %p64
      %s66 = ssub.s32 %s11, %s18
      %p67 = scmp.eq.s32.totalorder %s66, 0
      %s69 = sadd.s32 %s68, 1
      %s70 = scalar_select %p67, %s68, %s69
      %p73 = pneg %p67
      %p74 = scmp.eq.s32.totalorder %s11, 1
      %p75 = por %p73, %p74
      %p76 = scmp.ne.s32.totalorder %s68, %s71
      %p77 = scmp.eq.s32.totalorder %s11, 0
      %p78 = por %p76, %p77
      %p79 = scmp.ne.s32.totalorder %s68, %s71
      %p80 = scmp.eq.s32.totalorder %s16, 1
      %p81 = por %p79, %p80
      %p82 = scmp.ne.s32.totalorder %s71, %s72
      %p83 = scmp.eq.s32.totalorder %s16, 0
      %p84 = por %p82, %p83
      %p85 = scmp.ne.s32.totalorder %s71, %s72
      %p86 = scmp.eq.s32.totalorder %s17, 1
      %p87 = por %p85, %p86
      %p89 = scmp.ne.s32.totalorder %s72, %s88
      %p90 = scmp.eq.s32.totalorder %s17, 0
      %p91 = por %p89, %p90
      %p92 = scmp.le.s32.totalorder 1, %s11
      %p93 = scmp.lt.s32.totalorder %s11, 3
      %p94 = pnand %p92, %p93
      %p95 = pneg %p94
      // Predicated region
      $region9: #{value_forward.1} parent=5 // pred_check
        _
      $region10: #{value_forward.1} parent=5 // pred_check_branch
        %97 = sbr.rel (%p94) target = $region12
      $region11: #{value_forward.1} parent=5 // pred_region
        %s98 = ssub.s32 %s11, 1
        // Predicated region
        $region13: #{value_forward.1} parent=11 // pred_check
          %p99 = pneg %p58
        $region14: #{value_forward.1} parent=11 // pred_check_branch
          %101 = sbr.rel (%p99) target = $region16
        $region15: #{value_forward.1} parent=11 // pred_region
          _
        $region16: #{value_forward.1} parent=11 // pred_fallthru
          _
      $region12: #{value_forward.1} parent=5 // pred_fallthru
        _
      %p102 = scmp.lt.s32.totalorder %s11, 2
      // Predicated region
      $region17: #{value_forward.1} parent=5 // pred_check
        %p103 = pneg %p102
      $region18: #{value_forward.1} parent=5 // pred_check_branch
        %105 = sbr.rel (%p103) target = $region20
      $region19: #{value_forward.1} parent=5 // pred_region
        // Predicated region
        $region21: #{value_forward.1} parent=19 // pred_check
          %p106 = pneg %p31
        $region22: #{value_forward.1} parent=19 // pred_check_branch
          %108 = sbr.rel (%p106) target = $region24
        $region23: #{value_forward.1} parent=19 // pred_region
          %p109 = scmp.lt.s32.totalorder %s11, 1
          %s110 = scalar_select %p109, %s11, 1
          %s111 = smul.addr %s110, 8
          %s112 = scalar_lea.vmem %s0, %s111
        $region24: #{value_forward.1} parent=19 // pred_fallthru
          _
      $region20: #{value_forward.1} parent=5 // pred_fallthru
        _
      %p113 = scmp.le.s32.totalorder 1, %s11
      %p114 = scmp.lt.s32.totalorder %s11, 3
      %p115 = pnand %p113, %p114
      %p116 = pneg %p115
      // Predicated region
      $region25: #{value_forward.1} parent=5 // pred_check
        _
      $region26: #{value_forward.1} parent=5 // pred_check_branch
        %118 = sbr.rel (%p115) target = $region28
      $region27: #{value_forward.1} parent=5 // pred_region
        %s119 = ssub.s32 %s11, 1
        %p120 = scmp.lt.s32.totalorder %s16, 1
        %s121 = scalar_select %p120, %s16, 1
        %s122 = smul.addr %s121, 8
        %s123 = scalar_lea.vmem %s0, %s122
        %p124 = pneg %p37
        %p125 = pneg %p34
        %p126 = pneg %p58
        %p127 = pneg %p55
        %p128 = pneg %p84
        %p129 = pneg %p81
        %s130 = sand.u32 %s71, 1
        %s131 = scalar_lea.sflag [#allocation3], %s130
        %s132 = sand.u32 %s71, 1
        %s133 = smul.addr %s132, 8
        %s134 = scalar_lea.vmem [#allocation2], %s133
        %p135 = scmp.lt.s32.totalorder %s16, 1
        %s136 = scalar_select %p135, %s16, 1
        %s137 = smul.addr %s136, 8
        %s138 = scalar_lea.vmem %s0, %s137
        %v139 = vld [vmem:[%s138] sm:$0xff]
        %v140 = vld [vmem:[%s1] sm:$0xff]
        %v141 = vld [vmem:[%s1 + $0x8] sm:$0xff]
        %v142 = vld [vmem:[%s1 + $0x10] sm:$0xff]
        %v143 = vld [vmem:[%s1 + $0x18] sm:$0xff]
        %vm144 = vcmask 261120
        %v146 = vsel %vm144, %v139, 0
        %148 = vmatpush.msra.mxu0 0.0
        %149 = vmatpush.msra.mxu0 0.0
        %150 = vmatpush.msra.mxu0 0.0
        %151 = vmatpush.msra.mxu0 0.0
        %152 = vmatpush.msra.mxu0 0.0
        %153 = vmatpush.msra.mxu0 0.0
        %154 = vmatpush.msra.mxu0 0.0
        %155 = vmatpush.msra.mxu0 0.0
        %156 = vmatpush.msra.mxu0 0.0
        %157 = vmatpush.msra.mxu0 0.0
        %158 = vmatpush.msra.mxu0 0.0
        %159 = vmatpush.msra.mxu0 0.0
        %160 = vmatpush.msra.mxu0 %v143
        %161 = vmatpush.msra.mxu0 %v142
        %162 = vmatpush.msra.mxu0 %v141
        %163 = vmatpush.msra.mxu0 %v140
        %164 = vmatmul.f32.gmra.mxu0 %v146
        %v165 = vpop.f32.mrf.mxu0
        %v166 = vadd.f32 0.0, %v165
        %167 = vdwg.mxu0
        %168 = vst.msk [vmem:[%s134] sm:$0xff] %vm144, %v166
        %s169 = sand.u32 %s71, 1
        %s170 = scalar_lea.sflag [#allocation3], %s169
        %s171 = sand.u32 %s71, 1
        %s172 = smul.addr %s171, 8
        %s173 = scalar_lea.vmem [#allocation2], %s172
        // Predicated region
        $region29: #{value_forward.1} parent=27 // pred_check
          %p174 = pneg %p81
        $region30: #{value_forward.1} parent=27 // pred_check_branch
          %176 = sbr.rel (%p174) target = $region32
        $region31: #{value_forward.1} parent=27 // pred_region
          %178 = vsyncadd %s170, 0
          %s179 = smul.addr %s16, 8
          %s180 = scalar_lea.hbm %s2, %s179
          %s182 = sshll.u32 %s173, 4
          %s183 = int_to_ptr.vmem [resolvable:$true] %s182
          %s184 = sshll.u32 %s180, 4
          %s185 = int_to_ptr.hbm [resolvable:$true] %s184
          %187 = dma.vmem_to_hbm [thread:$0]  %s183, 128, %s185, %s170
        $region32: #{value_forward.1} parent=27 // pred_fallthru
          _
      $region28: #{value_forward.1} parent=5 // pred_fallthru
        _
      %p188 = scmp.le.s32.totalorder 2, %s11
      // Predicated region
      $region33: #{value_forward.1} parent=5 // pred_check
        %p189 = pneg %p188
      $region34: #{value_forward.1} parent=5 // pred_check_branch
        %191 = sbr.rel (%p189) target = $region36
      $region35: #{value_forward.1} parent=5 // pred_region
        %s192 = ssub.s32 %s11, 2
        // Predicated region
        $region37: #{value_forward.1} parent=35 // pred_check
          %p193 = pneg %p87
        $region38: #{value_forward.1} parent=35 // pred_check_branch
          %195 = sbr.rel (%p193) target = $region40
        $region39: #{value_forward.1} parent=35 // pred_region
          %s196 = sand.u32 %s72, 1
          %s197 = scalar_lea.sflag [#allocation3], %s196
          %s198 = sand.u32 %s72, 1
          %s199 = smul.addr %s198, 8
          %s200 = scalar_lea.vmem [#allocation2], %s199
          %202 = dma.done %s197, 128
        $region40: #{value_forward.1} parent=35 // pred_fallthru
          _
      $region36: #{value_forward.1} parent=5 // pred_fallthru
        _
    $region6: #{value_forward.1} parent=1 // loop_footer
      %s15 = sadd.s32 1, %s11
    $region7: #{value_forward.1} parent=1 // loop_footer_branch
      %10 = sbr.rel target = $region3
    $region8: #{value_forward.1} parent=1 // loop_exit
      _
    %203 = vsyncpa [#allocation3], 1
    %s204 = scalar_lea.sflag [#allocation3], 1
    %205 = vsyncpa %s204, 1

</llo_original>
